<compile_context>
chip_gen: v7x
topology: tpu7x:2x2x1
jax: 0.10.0
libtpu: 0.0.40
codegen_flags: <defaults>
</compile_context>

<pallas_src>
import functools

import numpy as np

import jax
import jax.numpy as jnp
from jax.experimental import pallas as pl
from jax.experimental.pallas import tpu as pltpu


def _round_up(x, m):
    return ((x + m - 1) // m) * m


def _build_seg_info(irreps_head, num_heads):
    """Static segment metadata, mirroring the PyTorch __init__.

    Returns (seg_info, head_dim) where seg_info is a tuple of
    (mid_start, per_head_seg_len, dst_start_in_head).
    """
    seg_info = []
    mid_start = 0   # start column in x (irreps_mid_in layout)
    dst_start = 0   # start column inside one head (irreps_head layout)
    for mul, ir_dim in irreps_head:
        seg_len = mul * ir_dim                   # per-head length of this irrep
        seg_info.append((mid_start, seg_len, dst_start))
        mid_start += num_heads * seg_len         # mid_in has mul*num_heads copies
        dst_start += seg_len
    return tuple(seg_info), dst_start            # dst_start == head_dim


def _vec2attnheads_kernel(x_ref, o_ref, *, num_heads, seg_info):
    """Pure column re-arrangement.

    Loads the whole [tile_n, C] input tile once, assembles the permuted columns
    in registers (static slices -> trace-time unrolled), and issues a single
    dense [tile_n, C] store (lane-dense output, no masked vst per narrow slice).
    All work is per-row, so OOB-padded tail rows never contaminate valid rows.
    """
    x = x_ref[...]
    cols = []
    for h in range(num_heads):
        for (mid_start, seg_len, _dst_start) in seg_info:
            src = mid_start + h * seg_len
            cols.append(x[:, src:src + seg_len])
    o_ref[...] = jnp.concatenate(cols, axis=1)


def vec2attnheads(x, irreps_head, num_heads, *, tile_n=None,
                  vmem_budget_bytes=24 * 1024 * 1024):
    """irreps_head: list of (mul, ir_dim) pairs (e.g. (8,1) ~ 8x0e, (4,3) ~ 4x1e)."""
    seg_info, head_dim = _build_seg_info(irreps_head, num_heads)
    N, C = x.shape
    assert C == num_heads * head_dim, (C, num_heads, head_dim)

    dtype_bytes = jnp.dtype(x.dtype).itemsize
    if tile_n is None:
        # Double-buffered input tile + double-buffered output tile, both
        # [tile_n, C], must fit comfortably under the default scoped-VMEM limit
        # (32 MiB on v7x) -> budget 24 MiB. Cap rows at 2048; measured copies
        # reach ~85% of HBM roofline at >=512-row tiles.
        tile_n = vmem_budget_bytes // max(1, 2 * 2 * C * dtype_bytes)
        tile_n = max(8, min(tile_n, 2048))
    # Never exceed the (8-padded) row count; keep sublane-aligned.
    tile_n = _round_up(min(tile_n, _round_up(N, 8)), 8)

    kernel = functools.partial(
        _vec2attnheads_kernel, num_heads=num_heads, seg_info=seg_info
    )

    grid = (pl.cdiv(N, tile_n),)   # ragged tail handled by Pallas OOB masking
    out2d = pl.pallas_call(
        kernel,
        out_shape=jax.ShapeDtypeStruct((N, C), x.dtype),
        grid=grid,
        in_specs=[pl.BlockSpec((tile_n, C), lambda i: (i, 0))],
        out_specs=pl.BlockSpec((tile_n, C), lambda i: (i, 0)),
        compiler_params=pltpu.CompilerParams(
            dimension_semantics=("parallel",),
        ),
    )(x)

    # Free wrapper-side reshape: the kernel writes a lane-dense [N, H*D] slab.
    return out2d.reshape(N, num_heads, head_dim)


def vec2attnheads_ref(x, irreps_head, num_heads):
    """Pure-JAX reference mirroring the PyTorch forward."""
    N = x.shape[0]
    out = []
    start = 0
    for mul, ir_dim in irreps_head:
        seg = mul * ir_dim * num_heads
        out.append(x[:, start:start + seg].reshape(N, num_heads, -1))
        start += seg
    return jnp.concatenate(out, axis=2)


if __name__ == "__main__":
    # Synthetic irreps: "8x0e + 4x1e + 2x2e" per head -> head_dim = 8+12+10 = 30
    irreps_head = [(8, 1), (4, 3), (2, 5)]
    num_heads = 4
    head_dim = sum(mul * d for mul, d in irreps_head)    # 30
    C = num_heads * head_dim                              # 120

    key = jax.random.PRNGKey(0)

    # Case 1: row count divisible by 8.
    N = 48
    x = jax.random.normal(key, (N, C), dtype=jnp.float32)
    out = jax.block_until_ready(vec2attnheads(x, irreps_head, num_heads))
    ref = vec2attnheads_ref(x, irreps_head, num_heads)
    assert out.shape == (N, num_heads, head_dim), out.shape
    # Pure copy -> bit-exact.
    assert bool(jnp.array_equal(out, ref)), "mismatch vs reference (N=48)"

    # Case 2: ragged row count (exercises the cdiv grid + masked OOB tail).
    N2 = 37
    x2 = jax.random.normal(jax.random.PRNGKey(1), (N2, C), dtype=jnp.float32)
    out2 = jax.block_until_ready(vec2attnheads(x2, irreps_head, num_heads))
    ref2 = vec2attnheads_ref(x2, irreps_head, num_heads)
    assert out2.shape == (N2, num_heads, head_dim), out2.shape
    assert bool(jnp.array_equal(out2, ref2)), "mismatch vs reference (N=37)"

    print("KERNEL_OK")
</pallas_src>

<mosaic_0001>
module attributes {stable_mosaic.version = 11 : i64} {
  func.func @_vec2attnheads_kernel(%arg0: i32, %arg1: memref<48x120xf32, #tpu.memory_space<vmem>>, %arg2: memref<48x120xf32, #tpu.memory_space<vmem>>) attributes {dimension_semantics = [#tpu.dimension_semantics<parallel>], iteration_bounds = array<i64: 1>, scalar_prefetch = 0 : i64, scratch_operands = 0 : i64, tpu.core_type = #tpu.core_type<tc>, window_params = [{transform_indices = @transform_0, window_bounds = array<i64: 48, 120>}, {transform_indices = @transform_1, window_bounds = array<i64: 48, 120>}]} {
    %c0 = arith.constant 0 : index
    %c0_0 = arith.constant 0 : index
    %0 = vector.load %arg1[%c0, %c0_0] : memref<48x120xf32, #tpu.memory_space<vmem>>, vector<48x120xf32>
    %1 = vector.extract_strided_slice %0 {offsets = [0, 0], sizes = [48, 8], strides = [1, 1]} : vector<48x120xf32> to vector<48x8xf32>
    %2 = vector.extract_strided_slice %0 {offsets = [0, 32], sizes = [48, 12], strides = [1, 1]} : vector<48x120xf32> to vector<48x12xf32>
    %3 = vector.extract_strided_slice %0 {offsets = [0, 80], sizes = [48, 10], strides = [1, 1]} : vector<48x120xf32> to vector<48x10xf32>
    %4 = vector.extract_strided_slice %0 {offsets = [0, 8], sizes = [48, 8], strides = [1, 1]} : vector<48x120xf32> to vector<48x8xf32>
    %5 = vector.extract_strided_slice %0 {offsets = [0, 44], sizes = [48, 12], strides = [1, 1]} : vector<48x120xf32> to vector<48x12xf32>
    %6 = vector.extract_strided_slice %0 {offsets = [0, 90], sizes = [48, 10], strides = [1, 1]} : vector<48x120xf32> to vector<48x10xf32>
    %7 = vector.extract_strided_slice %0 {offsets = [0, 16], sizes = [48, 8], strides = [1, 1]} : vector<48x120xf32> to vector<48x8xf32>
    %8 = vector.extract_strided_slice %0 {offsets = [0, 56], sizes = [48, 12], strides = [1, 1]} : vector<48x120xf32> to vector<48x12xf32>
    %9 = vector.extract_strided_slice %0 {offsets = [0, 100], sizes = [48, 10], strides = [1, 1]} : vector<48x120xf32> to vector<48x10xf32>
    %10 = vector.extract_strided_slice %0 {offsets = [0, 24], sizes = [48, 8], strides = [1, 1]} : vector<48x120xf32> to vector<48x8xf32>
    %11 = vector.extract_strided_slice %0 {offsets = [0, 68], sizes = [48, 12], strides = [1, 1]} : vector<48x120xf32> to vector<48x12xf32>
    %12 = vector.extract_strided_slice %0 {offsets = [0, 110], sizes = [48, 10], strides = [1, 1]} : vector<48x120xf32> to vector<48x10xf32>
    %13 = tpu.concatenate %1, %2, %3, %4, %5, %6, %7, %8, %9, %10, %11, %12 in 1 : vector<48x8xf32>, vector<48x12xf32>, vector<48x10xf32>, vector<48x8xf32>, vector<48x12xf32>, vector<48x10xf32>, vector<48x8xf32>, vector<48x12xf32>, vector<48x10xf32>, vector<48x8xf32>, vector<48x12xf32>, vector<48x10xf32> -> vector<48x120xf32>
    %c0_1 = arith.constant 0 : index
    %c0_2 = arith.constant 0 : index
    %14 = vector.load %arg2[%c0_1, %c0_2] : memref<48x120xf32, #tpu.memory_space<vmem>>, vector<48x120xf32>
    tpu.vector_store %arg2[%c0_1, %c0_2], %13 {strides = array<i32>} : memref<48x120xf32, #tpu.memory_space<vmem>>, vector<48x120xf32>,
    return
  }
  func.func @transform_0(%arg0: i32) -> (i32, i32) {
    %c0_i32 = arith.constant 0 : i32
    %c0_i32_0 = arith.constant 0 : i32
    return %arg0, %c0_i32 : i32, i32
  }
  func.func @transform_1(%arg0: i32) -> (i32, i32) {
    %c0_i32 = arith.constant 0 : i32
    %c0_i32_0 = arith.constant 0 : i32
    return %arg0, %c0_i32 : i32, i32
  }
}

</mosaic_0001>

<llo_original>
// kernel: tpu_custom_call.1
$region0: #{tpu_custom_call.1}
  #allocation0 [shape = 'u32[]', space=smem, size = 0x4, offset = 0x4, fixed_abs, tag = 'smem constant byte address 0x4 - core index']
  #allocation1 [shape = 'u32[144,128]{1,0:T(1,128)}', space=vmem, size = 0x12000, scoped, tag = 'internal scratch']
  %s0 = inlined_call_operand.hbm [shape: f32[48,120], index: 0, kind: input, shape index: {}]
  %s1 = inlined_call_operand.hbm [shape: f32[48,120], index: 1, kind: output, shape index: {}]
  %s2 = sld [smem:[#allocation0]]
  $region18: #{tpu_custom_call.1} parent=0
    _
  %s4 = ssub.s32 1, %s2
  %s5 = scalar_select 0, %s4, %s2
  $region1: #{tpu_custom_call.1} parent=0
    #allocation2 [shape = 'u8[24576]{0}', space=vmem, size = 0x6000, scoped, tag = 'input window, operand 0, single buffered']
    #allocation3 [shape = 's32[1]{0}', space=sflag, size = 0x4, scoped, tag = 'scoped memory for tpu_custom_call.1']
    #allocation4 [shape = 's32[1]{0}', space=sflag, size = 0x4, scoped, tag = 'scoped memory for tpu_custom_call.1']
    #allocation5 [shape = 'u8[24576]{0}', space=vmem, size = 0x6000, scoped, tag = 'output window, operand 0, single buffered']
    %6 = vsyncpa [#allocation3], 0
    %7 = vsyncpa [#allocation4], 0
    // Predicated region
    $region2: #{tpu_custom_call.1} parent=1 // pred_check
      _
    $region3: #{tpu_custom_call.1} parent=1 // pred_check_branch
      %9 = sbr.rel (0) target = $region5
    $region4: #{tpu_custom_call.1} parent=1 // pred_region
      %s11 = ssub.s32 768, 768
      %12 = vsyncadd [#allocation3], %s11
      %s13 = sshll.u32 [#allocation2], 4
      %s14 = int_to_ptr.vmem [resolvable:$true] %s13
      %19 = dma.hbm_to_vmem [thread:$0]  %s0, 768, %s14, [#allocation3], 128, 128, 8
    $region5: #{tpu_custom_call.1} parent=1 // pred_fallthru
      _
    // Predicated region
    $region6: #{tpu_custom_call.1} parent=1 // pred_check
      _
    $region7: #{tpu_custom_call.1} parent=1 // pred_check_branch
      %21 = sbr.rel (0) target = $region9
    $region8: #{tpu_custom_call.1} parent=1 // pred_region
      %22 = dma.done [#allocation3], 768
    $region9: #{tpu_custom_call.1} parent=1 // pred_fallthru
      _
    %v23 = vld [vmem:[#allocation2] sm:$0xff]
    %v24 = vld [vmem:[#allocation2 + $0x8] sm:$0xff]
    %v25 = vld [vmem:[#allocation2 + $0x10] sm:$0xff]
    %v26 = vld [vmem:[#allocation2 + $0x18] sm:$0xff]
    %v27 = vld [vmem:[#allocation2 + $0x20] sm:$0xff]
    %v28 = vld [vmem:[#allocation2 + $0x28] sm:$0xff]
    %35 = vrot.lane.b32.xlu0 %v23, 104
    %v36 = vpop.permute.xlu0 %35
    %37 = vrot.lane.b32.xlu0 %v24, 104
    %v38 = vpop.permute.xlu0 %37
    %39 = vrot.lane.b32.xlu0 %v25, 104
    %v40 = vpop.permute.xlu0 %39
    %41 = vrot.lane.b32.xlu0 %v26, 104
    %v42 = vpop.permute.xlu0 %41
    %43 = vrot.lane.b32.xlu0 %v27, 104
    %v44 = vpop.permute.xlu0 %43
    %45 = vrot.lane.b32.xlu0 %v28, 104
    %v46 = vpop.permute.xlu0 %45
    %53 = vrot.lane.b32.xlu0 %v23, 68
    %v54 = vpop.permute.xlu0 %53
    %55 = vrot.lane.b32.xlu0 %v24, 68
    %v56 = vpop.permute.xlu0 %55
    %57 = vrot.lane.b32.xlu0 %v25, 68
    %v58 = vpop.permute.xlu0 %57
    %59 = vrot.lane.b32.xlu0 %v26, 68
    %v60 = vpop.permute.xlu0 %59
    %61 = vrot.lane.b32.xlu0 %v27, 68
    %v62 = vpop.permute.xlu0 %61
    %63 = vrot.lane.b32.xlu0 %v28, 68
    %v64 = vpop.permute.xlu0 %63
    %71 = vrot.lane.b32.xlu0 %v23, 22
    %v72 = vpop.permute.xlu0 %71
    %73 = vrot.lane.b32.xlu0 %v24, 22
    %v74 = vpop.permute.xlu0 %73
    %75 = vrot.lane.b32.xlu0 %v25, 22
    %v76 = vpop.permute.xlu0 %75
    %77 = vrot.lane.b32.xlu0 %v26, 22
    %v78 = vpop.permute.xlu0 %77
    %79 = vrot.lane.b32.xlu0 %v27, 22
    %v80 = vpop.permute.xlu0 %79
    %81 = vrot.lane.b32.xlu0 %v28, 22
    %v82 = vpop.permute.xlu0 %81
    %89 = vrot.lane.b32.xlu0 %v23, 122
    %v90 = vpop.permute.xlu0 %89
    %91 = vrot.lane.b32.xlu0 %v24, 122
    %v92 = vpop.permute.xlu0 %91
    %93 = vrot.lane.b32.xlu0 %v25, 122
    %v94 = vpop.permute.xlu0 %93
    %95 = vrot.lane.b32.xlu0 %v26, 122
    %v96 = vpop.permute.xlu0 %95
    %97 = vrot.lane.b32.xlu0 %v27, 122
    %v98 = vpop.permute.xlu0 %97
    %99 = vrot.lane.b32.xlu0 %v28, 122
    %v100 = vpop.permute.xlu0 %99
    %107 = vrot.lane.b32.xlu0 %v23, 88
    %v108 = vpop.permute.xlu0 %107
    %109 = vrot.lane.b32.xlu0 %v24, 88
    %v110 = vpop.permute.xlu0 %109
    %111 = vrot.lane.b32.xlu0 %v25, 88
    %v112 = vpop.permute.xlu0 %111
    %113 = vrot.lane.b32.xlu0 %v26, 88
    %v114 = vpop.permute.xlu0 %113
    %115 = vrot.lane.b32.xlu0 %v27, 88
    %v116 = vpop.permute.xlu0 %115
    %117 = vrot.lane.b32.xlu0 %v28, 88
    %v118 = vpop.permute.xlu0 %117
    %125 = vrot.lane.b32.xlu0 %v23, 44
    %v126 = vpop.permute.xlu0 %125
    %127 = vrot.lane.b32.xlu0 %v24, 44
    %v128 = vpop.permute.xlu0 %127
    %129 = vrot.lane.b32.xlu0 %v25, 44
    %v130 = vpop.permute.xlu0 %129
    %131 = vrot.lane.b32.xlu0 %v26, 44
    %v132 = vpop.permute.xlu0 %131
    %133 = vrot.lane.b32.xlu0 %v27, 44
    %v134 = vpop.permute.xlu0 %133
    %135 = vrot.lane.b32.xlu0 %v28, 44
    %v136 = vpop.permute.xlu0 %135
    %143 = vrot.lane.b32.xlu0 %v23, 12
    %v144 = vpop.permute.xlu0 %143
    %145 = vrot.lane.b32.xlu0 %v24, 12
    %v146 = vpop.permute.xlu0 %145
    %147 = vrot.lane.b32.xlu0 %v25, 12
    %v148 = vpop.permute.xlu0 %147
    %149 = vrot.lane.b32.xlu0 %v26, 12
    %v150 = vpop.permute.xlu0 %149
    %151 = vrot.lane.b32.xlu0 %v27, 12
    %v152 = vpop.permute.xlu0 %151
    %153 = vrot.lane.b32.xlu0 %v28, 12
    %v154 = vpop.permute.xlu0 %153
    %161 = vrot.lane.b32.xlu0 %v23, 108
    %v162 = vpop.permute.xlu0 %161
    %163 = vrot.lane.b32.xlu0 %v24, 108
    %v164 = vpop.permute.xlu0 %163
    %165 = vrot.lane.b32.xlu0 %v25, 108
    %v166 = vpop.permute.xlu0 %165
    %167 = vrot.lane.b32.xlu0 %v26, 108
    %v168 = vpop.permute.xlu0 %167
    %169 = vrot.lane.b32.xlu0 %v27, 108
    %v170 = vpop.permute.xlu0 %169
    %171 = vrot.lane.b32.xlu0 %v28, 108
    %v172 = vpop.permute.xlu0 %171
    %179 = vrot.lane.b32.xlu0 %v23, 66
    %v180 = vpop.permute.xlu0 %179
    %181 = vrot.lane.b32.xlu0 %v24, 66
    %v182 = vpop.permute.xlu0 %181
    %183 = vrot.lane.b32.xlu0 %v25, 66
    %v184 = vpop.permute.xlu0 %183
    %185 = vrot.lane.b32.xlu0 %v26, 66
    %v186 = vpop.permute.xlu0 %185
    %187 = vrot.lane.b32.xlu0 %v27, 66
    %v188 = vpop.permute.xlu0 %187
    %189 = vrot.lane.b32.xlu0 %v28, 66
    %v190 = vpop.permute.xlu0 %189
    %197 = vrot.lane.b32.xlu0 %v23, 30
    %v198 = vpop.permute.xlu0 %197
    %199 = vrot.lane.b32.xlu0 %v24, 30
    %v200 = vpop.permute.xlu0 %199
    %201 = vrot.lane.b32.xlu0 %v25, 30
    %v202 = vpop.permute.xlu0 %201
    %203 = vrot.lane.b32.xlu0 %v26, 30
    %v204 = vpop.permute.xlu0 %203
    %205 = vrot.lane.b32.xlu0 %v27, 30
    %v206 = vpop.permute.xlu0 %205
    %207 = vrot.lane.b32.xlu0 %v28, 30
    %v208 = vpop.permute.xlu0 %207
    %vm215 = vcmask 64512
    %v216 = vsel %vm215, %v23, %v36
    %v217 = vsel %vm215, %v24, %v38
    %v218 = vsel %vm215, %v25, %v40
    %v219 = vsel %vm215, %v26, %v42
    %v220 = vsel %vm215, %v27, %v44
    %v221 = vsel %vm215, %v28, %v46
    %vm222 = vcmask 162816
    %v223 = vsel %vm222, %v216, %v54
    %v224 = vsel %vm222, %v217, %v56
    %v225 = vsel %vm222, %v218, %v58
    %v226 = vsel %vm222, %v219, %v60
    %v227 = vsel %vm222, %v220, %v62
    %v228 = vsel %vm222, %v221, %v64
    %vm229 = vcmask 244736
    %v230 = vsel %vm229, %v223, %v72
    %v231 = vsel %vm229, %v224, %v74
    %v232 = vsel %vm229, %v225, %v76
    %v233 = vsel %vm229, %v226, %v78
    %v234 = vsel %vm229, %v227, %v80
    %v235 = vsel %vm229, %v228, %v82
    %vm236 = vcmask 310272
    %v237 = vsel %vm236, %v230, %v90
    %v238 = vsel %vm236, %v231, %v92
    %v239 = vsel %vm236, %v232, %v94
    %v240 = vsel %vm236, %v233, %v96
    %v241 = vsel %vm236, %v234, %v98
    %v242 = vsel %vm236, %v235, %v100
    %vm243 = vcmask 408576
    %v244 = vsel %vm243, %v237, %v108
    %v245 = vsel %vm243, %v238, %v110
    %v246 = vsel %vm243, %v239, %v112
    %v247 = vsel %vm243, %v240, %v114
    %v248 = vsel %vm243, %v241, %v116
    %v249 = vsel %vm243, %v242, %v118
    %vm250 = vcmask 490496
    %v251 = vsel %vm250, %v244, %v126
    %v252 = vsel %vm250, %v245, %v128
    %v253 = vsel %vm250, %v246, %v130
    %v254 = vsel %vm250, %v247, %v132
    %v255 = vsel %vm250, %v248, %v134
    %v256 = vsel %vm250, %v249, %v136
    %vm257 = vcmask 556032
    %v258 = vsel %vm257, %v251, %v144
    %v259 = vsel %vm257, %v252, %v146
    %v260 = vsel %vm257, %v253, %v148
    %v261 = vsel %vm257, %v254, %v150
    %v262 = vsel %vm257, %v255, %v152
    %v263 = vsel %vm257, %v256, %v154
    %vm264 = vcmask 654336
    %v265 = vsel %vm264, %v258, %v162
    %v266 = vsel %vm264, %v259, %v164
    %v267 = vsel %vm264, %v260, %v166
    %v268 = vsel %vm264, %v261, %v168
    %v269 = vsel %vm264, %v262, %v170
    %v270 = vsel %vm264, %v263, %v172
    %vm271 = vcmask 736256
    %v272 = vsel %vm271, %v265, %v180
    %v273 = vsel %vm271, %v266, %v182
    %v274 = vsel %vm271, %v267, %v184
    %v275 = vsel %vm271, %v268, %v186
    %v276 = vsel %vm271, %v269, %v188
    %v277 = vsel %vm271, %v270, %v190
    %vm278 = vcmask 801792
    %v279 = vsel %vm278, %v272, %v198
    %v280 = vsel %vm278, %v273, %v200
    %v281 = vsel %vm278, %v274, %v202
    %v282 = vsel %vm278, %v275, %v204
    %v283 = vsel %vm278, %v276, %v206
    %v284 = vsel %vm278, %v277, %v208
    %vm285 = vcmask 900096
    %v286 = vsel %vm285, %v279, %v23
    %v287 = vsel %vm285, %v280, %v24
    %v288 = vsel %vm285, %v281, %v25
    %v289 = vsel %vm285, %v282, %v26
    %v290 = vsel %vm285, %v283, %v27
    %v291 = vsel %vm285, %v284, %v28
    %vm292 = vcmask 982016
    %293 = vst.msk [vmem:[#allocation5] sm:$0xff] %vm292, %v286
    %294 = vst.msk [vmem:[#allocation5 + $0x8] sm:$0xff] %vm292, %v287
    %295 = vst.msk [vmem:[#allocation5 + $0x10] sm:$0xff] %vm292, %v288
    %296 = vst.msk [vmem:[#allocation5 + $0x18] sm:$0xff] %vm292, %v289
    %297 = vst.msk [vmem:[#allocation5 + $0x20] sm:$0xff] %vm292, %v290
    %298 = vst.msk [vmem:[#allocation5 + $0x28] sm:$0xff] %vm292, %v291
    // Predicated region
    $region10: #{tpu_custom_call.1} parent=1 // pred_check
      _
    $region11: #{tpu_custom_call.1} parent=1 // pred_check_branch
      %300 = sbr.rel (0) target = $region13
    $region12: #{tpu_custom_call.1} parent=1 // pred_region
      %s302 = ssub.s32 768, 768
      %303 = vsyncadd [#allocation4], %s302
      %s304 = sshll.u32 [#allocation5], 4
      %s305 = int_to_ptr.vmem [resolvable:$true] %s304
      %310 = dma.vmem_to_hbm [thread:$0]  %s305, 768, %s1, [#allocation4], 128, 128, 8
    $region13: #{tpu_custom_call.1} parent=1 // pred_fallthru
      _
    // Predicated region
    $region14: #{tpu_custom_call.1} parent=1 // pred_check
      _
    $region15: #{tpu_custom_call.1} parent=1 // pred_check_branch
      %312 = sbr.rel (0) target = $region17
    $region16: #{tpu_custom_call.1} parent=1 // pred_region
      %313 = dma.done [#allocation4], 768
    $region17: #{tpu_custom_call.1} parent=1 // pred_fallthru
      _
    %314 = vsyncpa [#allocation3], 1
    %315 = vsyncpa [#allocation4], 1

</llo_original>
